<compile_context>
chip_gen: v7x
topology: tpu7x:2x2x1
jax: 0.10.0
libtpu: 0.0.40
codegen_flags: <defaults>
</compile_context>

<pallas_src>
import functools

import jax
import jax.numpy as jnp
from jax.experimental import pallas as pl
from jax.experimental.pallas import tpu as pltpu


def _round_up(n, m):
    return ((n + m - 1) // m) * m


def _choose_batch_tile(bp, tile_b):
    """Largest multiple-of-8 divisor of bp that is <= tile_b, preferring a
    choice that yields >= 2 grid steps (so the 'parallel' batch axis can be
    sharded across v7x's two TensorCores). bp is a multiple of 8."""
    cap = min(tile_b, bp)
    divisors = [t for t in range(8, cap + 1, 8) if bp % t == 0]
    if not divisors:
        return 8
    if bp >= 16:
        multi_step = [t for t in divisors if bp // t >= 2]
        if multi_step:
            return max(multi_step)
    return max(divisors)


def critic_kernel(x_ref, w1_ref, b1_ref, w2_ref, b2_ref, w3_ref, b3_ref, out_ref):
    # fc1 + ReLU: bf16 operands (cast in-kernel), f32 accumulation, f32 bias/ReLU.
    x = x_ref[...].astype(w1_ref.dtype)
    h1 = jnp.dot(x, w1_ref[...], preferred_element_type=jnp.float32)
    h1 = jnp.maximum(h1 + b1_ref[...], 0.0)
    # fc2 + ReLU
    h2 = jnp.dot(h1.astype(w2_ref.dtype), w2_ref[...],
                 preferred_element_type=jnp.float32)
    h2 = jnp.maximum(h2 + b2_ref[...], 0.0)
    # fc3 (no activation) — narrow (tb, A) output block, f32 store.
    out = jnp.dot(h2.astype(w3_ref.dtype), w3_ref[...],
                  preferred_element_type=jnp.float32)
    out_ref[...] = (out + b3_ref[...]).astype(out_ref.dtype)


@functools.partial(jax.jit, static_argnames=("tile_b",))
def critic_forward(x, params, *, tile_b=1024):
    """x: [B, state_dim] float32. params: dict of (w1,b1,w2,b2,w3,b3).

    Returns [B, action_space] float32, matching the PyTorch forward up to
    bf16 matmul-operand rounding (accumulation is f32)."""
    w1, b1, w2, b2, w3, b3 = (params[k] for k in ("w1", "b1", "w2", "b2", "w3", "b3"))
    B, S = x.shape
    H1, H2, A = w1.shape[1], w2.shape[1], w3.shape[1]

    # Batch padded only to a multiple of 8 (sublane); tile divides it exactly.
    Bp = _round_up(max(B, 8), 8)
    tb = _choose_batch_tile(Bp, tile_b)
    grid = (Bp // tb,)

    if Bp != B:
        x = jnp.pad(x, ((0, Bp - B), (0, 0)))

    # Weights to bf16 (MXU operand dtype); biases stay f32 as (1, F) rows.
    w1c = w1.astype(jnp.bfloat16)
    w2c = w2.astype(jnp.bfloat16)
    w3c = w3.astype(jnp.bfloat16)
    b1r = b1.reshape(1, H1).astype(jnp.float32)
    b2r = b2.reshape(1, H2).astype(jnp.float32)
    b3r = b3.reshape(1, A).astype(jnp.float32)

    flops = 2 * B * (S * H1 + H1 * H2 + H2 * A)
    bytes_accessed = (
        x.size * x.dtype.itemsize
        + sum(a.size * a.dtype.itemsize for a in (w1c, b1r, w2c, b2r, w3c, b3r))
        + Bp * A * 4
    )

    def full_spec(a):
        # Whole (tiny) array resident in VMEM, same block every grid step.
        return pl.BlockSpec(a.shape, lambda i: (0, 0))

    out = pl.pallas_call(
        critic_kernel,
        out_shape=jax.ShapeDtypeStruct((Bp, A), jnp.float32),
        grid=grid,
        in_specs=[
            pl.BlockSpec((tb, S), lambda i: (i, 0)),   # x tiled over batch
            full_spec(w1c), full_spec(b1r),
            full_spec(w2c), full_spec(b2r),
            full_spec(w3c), full_spec(b3r),
        ],
        out_specs=pl.BlockSpec((tb, A), lambda i: (i, 0)),
        compiler_params=pltpu.CompilerParams(
            dimension_semantics=("parallel",),   # shards batch across v7x's 2 TCs
        ),
        cost_estimate=pl.CostEstimate(
            flops=flops, transcendentals=0, bytes_accessed=bytes_accessed),
    )(x, w1c, b1r, w2c, b2r, w3c, b3r)

    if Bp != B:
        out = out[:B]
    return out


def init_critic_params(key, state_dim, action_space=1, fc1_unit=64, fc2_unit=64):
    """Deterministic init mirroring PyTorch nn.Linear default
    (U[-1/sqrt(fan_in), 1/sqrt(fan_in)]); weights stored as [in, out]."""
    def linear(k, fan_in, fan_out):
        kw, kb = jax.random.split(k)
        bound = 1.0 / jnp.sqrt(fan_in)
        w = jax.random.uniform(kw, (fan_in, fan_out), jnp.float32, -bound, bound)
        b = jax.random.uniform(kb, (1, fan_out), jnp.float32, -bound, bound)
        return w, b

    k1, k2, k3 = jax.random.split(key, 3)
    w1, b1 = linear(k1, state_dim, fc1_unit)
    w2, b2 = linear(k2, fc1_unit, fc2_unit)
    w3, b3 = linear(k3, fc2_unit, action_space)
    return {"w1": w1, "b1": b1, "w2": w2, "b2": b2, "w3": w3, "b3": b3}


def critic_ref(x, params):
    """Pure-JAX f32 reference of the PyTorch forward pass."""
    h = jnp.maximum(x @ params["w1"] + params["b1"], 0.0)
    h = jnp.maximum(h @ params["w2"] + params["b2"], 0.0)
    return h @ params["w3"] + params["b3"]


def critic_ref_mixed(x, params, matmul_dtype=jnp.bfloat16):
    """Pure-JAX reference mirroring the kernel's bf16-operand / f32-accumulate math."""
    def mm(a, w):
        return jnp.dot(a.astype(matmul_dtype), w.astype(matmul_dtype),
                       preferred_element_type=jnp.float32)
    h = jnp.maximum(mm(x, params["w1"]) + params["b1"], 0.0)
    h = jnp.maximum(mm(h, params["w2"]) + params["b2"], 0.0)
    return mm(h, params["w3"]) + params["b3"]


if __name__ == "__main__":
    key = jax.random.PRNGKey(0)
    k_x, k_p = jax.random.split(key)

    batch = 8
    state_dim = 32
    action_space = 1

    x = jax.random.normal(k_x, (batch, state_dim), jnp.float32)
    params = init_critic_params(k_p, state_dim, action_space=action_space,
                                fc1_unit=64, fc2_unit=64)

    out = critic_forward(x, params)
    out = jax.block_until_ready(out)
    assert out.shape == (batch, action_space), out.shape

    # Tight check vs a reference doing the same bf16-operand / f32-acc math.
    ref_mixed = critic_ref_mixed(x, params)
    assert jnp.allclose(out, ref_mixed, atol=1e-4, rtol=1e-4), \
        "mismatch vs mixed-precision reference"

    # Loose check vs the full-f32 PyTorch-equivalent forward.
    ref_f32 = critic_ref(x, params)
    assert jnp.allclose(out, ref_f32, atol=5e-2, rtol=5e-2), \
        "mismatch vs f32 reference"

    # Second run with a non-multiple-of-8 batch: exercises the batch-pad path
    # and a multi-step (2-tile) grid so the 'parallel' axis actually has work
    # for two cores.
    x2 = jax.random.normal(jax.random.PRNGKey(1), (13, state_dim), jnp.float32)
    out2 = jax.block_until_ready(critic_forward(x2, params))
    assert out2.shape == (13, action_space), out2.shape
    assert jnp.allclose(out2, critic_ref_mixed(x2, params), atol=1e-4, rtol=1e-4), \
        "mismatch vs mixed-precision reference (padded-batch path)"

    print("KERNEL_OK")
</pallas_src>

<mosaic_0001>
module attributes {stable_mosaic.version = 11 : i64} {
  func.func @critic_kernel(%arg0: i32, %arg1: memref<8x32xf32, #tpu.memory_space<vmem>>, %arg2: memref<32x64xbf16, #tpu.memory_space<vmem>>, %arg3: memref<1x64xf32, #tpu.memory_space<vmem>>, %arg4: memref<64x64xbf16, #tpu.memory_space<vmem>>, %arg5: memref<1x64xf32, #tpu.memory_space<vmem>>, %arg6: memref<64x1xbf16, #tpu.memory_space<vmem>>, %arg7: memref<1x1xf32, #tpu.memory_space<vmem>>, %arg8: memref<8x1xf32, #tpu.memory_space<vmem>>) attributes {dimension_semantics = [#tpu.dimension_semantics<parallel>], iteration_bounds = array<i64: 1>, scalar_prefetch = 0 : i64, scratch_operands = 0 : i64, tpu.core_type = #tpu.core_type<tc>, window_params = [{transform_indices = @transform_0, window_bounds = array<i64: 8, 32>}, {pipeline_mode = #tpu.pipeline_mode<synchronous>, transform_indices = @transform_1, window_bounds = array<i64: 32, 64>}, {pipeline_mode = #tpu.pipeline_mode<synchronous>, transform_indices = @transform_2, window_bounds = array<i64: 1, 64>}, {pipeline_mode = #tpu.pipeline_mode<synchronous>, transform_indices = @transform_3, window_bounds = array<i64: 64, 64>}, {pipeline_mode = #tpu.pipeline_mode<synchronous>, transform_indices = @transform_4, window_bounds = array<i64: 1, 64>}, {pipeline_mode = #tpu.pipeline_mode<synchronous>, transform_indices = @transform_5, window_bounds = array<i64: 64, 1>}, {pipeline_mode = #tpu.pipeline_mode<synchronous>, transform_indices = @transform_6, window_bounds = array<i64: 1, 1>}, {transform_indices = @transform_7, window_bounds = array<i64: 8, 1>}]} {
    %c0 = arith.constant 0 : index
    %c0_0 = arith.constant 0 : index
    %0 = vector.load %arg1[%c0, %c0_0] : memref<8x32xf32, #tpu.memory_space<vmem>>, vector<8x32xf32>
    %1 = arith.truncf %0 : vector<8x32xf32> to vector<8x32xbf16>
    %c0_1 = arith.constant 0 : index
    %c0_2 = arith.constant 0 : index
    %2 = vector.load %arg2[%c0_1, %c0_2] : memref<32x64xbf16, #tpu.memory_space<vmem>>, vector<32x64xbf16>
    %cst = arith.constant dense<0.000000e+00> : vector<8x64xf32>
    %3 = tpu.matmul %1, %2, %cst {dimension_numbers = #tpu.dot_dimension_numbers<[1], [0], [0], [1], [0, 0, 1, 1], [], []>} : vector<8x32xbf16>, vector<32x64xbf16>, vector<8x64xf32> -> vector<8x64xf32>
    %c0_3 = arith.constant 0 : index
    %c0_4 = arith.constant 0 : index
    %4 = vector.load %arg3[%c0_3, %c0_4] : memref<1x64xf32, #tpu.memory_space<vmem>>, vector<1x64xf32>
    %5 = vector.broadcast %4 : vector<1x64xf32> to vector<8x64xf32>
    %6 = arith.addf %3, %5 : vector<8x64xf32>
    %cst_5 = arith.constant 0.000000e+00 : f32
    %7 = vector.broadcast %cst_5 : f32 to vector<8x64xf32>
    %8 = arith.maximumf %6, %7 : vector<8x64xf32>
    %9 = arith.truncf %8 : vector<8x64xf32> to vector<8x64xbf16>
    %c0_6 = arith.constant 0 : index
    %c0_7 = arith.constant 0 : index
    %10 = vector.load %arg4[%c0_6, %c0_7] : memref<64x64xbf16, #tpu.memory_space<vmem>>, vector<64x64xbf16>
    %cst_8 = arith.constant dense<0.000000e+00> : vector<8x64xf32>
    %11 = tpu.matmul %9, %10, %cst_8 {dimension_numbers = #tpu.dot_dimension_numbers<[1], [0], [0], [1], [0, 0, 1, 1], [], []>} : vector<8x64xbf16>, vector<64x64xbf16>, vector<8x64xf32> -> vector<8x64xf32>
    %c0_9 = arith.constant 0 : index
    %c0_10 = arith.constant 0 : index
    %12 = vector.load %arg5[%c0_9, %c0_10] : memref<1x64xf32, #tpu.memory_space<vmem>>, vector<1x64xf32>
    %13 = vector.broadcast %12 : vector<1x64xf32> to vector<8x64xf32>
    %14 = arith.addf %11, %13 : vector<8x64xf32>
    %cst_11 = arith.constant 0.000000e+00 : f32
    %15 = vector.broadcast %cst_11 : f32 to vector<8x64xf32>
    %16 = arith.maximumf %14, %15 : vector<8x64xf32>
    %17 = arith.truncf %16 : vector<8x64xf32> to vector<8x64xbf16>
    %c0_12 = arith.constant 0 : index
    %c0_13 = arith.constant 0 : index
    %18 = vector.load %arg6[%c0_12, %c0_13] : memref<64x1xbf16, #tpu.memory_space<vmem>>, vector<64x1xbf16>
    %cst_14 = arith.constant dense<0.000000e+00> : vector<8x1xf32>
    %19 = tpu.matmul %17, %18, %cst_14 {dimension_numbers = #tpu.dot_dimension_numbers<[1], [0], [0], [1], [0, 0, 1, 1], [], []>} : vector<8x64xbf16>, vector<64x1xbf16>, vector<8x1xf32> -> vector<8x1xf32>
    %c0_15 = arith.constant 0 : index
    %c0_16 = arith.constant 0 : index
    %20 = vector.load %arg7[%c0_15, %c0_16] : memref<1x1xf32, #tpu.memory_space<vmem>>, vector<1x1xf32>
    %21 = vector.broadcast %20 : vector<1x1xf32> to vector<8x1xf32>
    %22 = arith.addf %19, %21 : vector<8x1xf32>
    %c0_17 = arith.constant 0 : index
    %c0_18 = arith.constant 0 : index
    %23 = vector.load %arg8[%c0_17, %c0_18] : memref<8x1xf32, #tpu.memory_space<vmem>>, vector<8x1xf32>
    tpu.vector_store %arg8[%c0_17, %c0_18], %22 {strides = array<i32>} : memref<8x1xf32, #tpu.memory_space<vmem>>, vector<8x1xf32>,
    return
  }
  func.func @transform_0(%arg0: i32) -> (i32, i32) {
    %c0_i32 = arith.constant 0 : i32
    %c0_i32_0 = arith.constant 0 : i32
    return %arg0, %c0_i32 : i32, i32
  }
  func.func @transform_1(%arg0: i32) -> (i32, i32) {
    %c0_i32 = arith.constant 0 : i32
    %c0_i32_0 = arith.constant 0 : i32
    %c0_i32_1 = arith.constant 0 : i32
    return %c0_i32, %c0_i32_0 : i32, i32
  }
  func.func @transform_2(%arg0: i32) -> (i32, i32) {
    %c0_i32 = arith.constant 0 : i32
    %c0_i32_0 = arith.constant 0 : i32
    %c0_i32_1 = arith.constant 0 : i32
    return %c0_i32, %c0_i32_0 : i32, i32
  }
  func.func @transform_3(%arg0: i32) -> (i32, i32) {
    %c0_i32 = arith.constant 0 : i32
    %c0_i32_0 = arith.constant 0 : i32
    %c0_i32_1 = arith.constant 0 : i32
    return %c0_i32, %c0_i32_0 : i32, i32
  }
  func.func @transform_4(%arg0: i32) -> (i32, i32) {
    %c0_i32 = arith.constant 0 : i32
    %c0_i32_0 = arith.constant 0 : i32
    %c0_i32_1 = arith.constant 0 : i32
    return %c0_i32, %c0_i32_0 : i32, i32
  }
  func.func @transform_5(%arg0: i32) -> (i32, i32) {
    %c0_i32 = arith.constant 0 : i32
    %c0_i32_0 = arith.constant 0 : i32
    %c0_i32_1 = arith.constant 0 : i32
    return %c0_i32, %c0_i32_0 : i32, i32
  }
  func.func @transform_6(%arg0: i32) -> (i32, i32) {
    %c0_i32 = arith.constant 0 : i32
    %c0_i32_0 = arith.constant 0 : i32
    %c0_i32_1 = arith.constant 0 : i32
    return %c0_i32, %c0_i32_0 : i32, i32
  }
  func.func @transform_7(%arg0: i32) -> (i32, i32) {
    %c0_i32 = arith.constant 0 : i32
    %c0_i32_0 = arith.constant 0 : i32
    return %arg0, %c0_i32 : i32, i32
  }
}

</mosaic_0001>

<llo_original>
// kernel: critic_forward.1
$region0: #{critic_forward.1}
  #allocation0 [shape = 'u32[]', space=smem, size = 0x4, offset = 0x4, fixed_abs, tag = 'smem constant byte address 0x4 - core index']
  #allocation1 [shape = 'u32[144,128]{1,0:T(1,128)}', space=vmem, size = 0x12000, scoped, tag = 'internal scratch']
  #allocation2 [shape = 'f32[1,1]{1,0:T(1,128)S(1)}', space=vmem, size = 0x200, scoped, tag = 'scoped memory for critic_forward.1']
  %s0 = inlined_call_operand.vmem [shape: f32[8,32], index: 0, kind: input, shape index: {}]
  %s1 = inlined_call_operand.vmem [shape: bf16[32,64], index: 1, kind: input, shape index: {}]
  %s2 = inlined_call_operand.vmem [shape: f32[1,64], index: 2, kind: input, shape index: {}]
  %s3 = inlined_call_operand.vmem [shape: bf16[64,64], index: 3, kind: input, shape index: {}]
  %s4 = inlined_call_operand.vmem [shape: f32[1,64], index: 4, kind: input, shape index: {}]
  %s5 = inlined_call_operand.vmem [shape: bf16[64,1], index: 5, kind: input, shape index: {}]
  %s6 = inlined_call_operand.<no memory space> [shape: f32[1,1], index: 6, kind: input, shape index: {}]
  %s7 = inlined_call_operand.vmem [shape: f32[8,1], index: 7, kind: output, shape index: {}]
  %s8 = sld [smem:[#allocation0]]
  $region38: #{critic_forward.1} parent=0
    _
  %s10 = ssub.s32 1, %s8
  %s11 = scalar_select 0, %s10, %s8
  %v12 = vstv %s6
  %13 = vst [vmem:[#allocation2] sm:$0x1] %v12
  // Predicated region
  $region2: #{critic_forward.1} parent=0 // pred_check
    _
  $region3: #{critic_forward.1} parent=0 // pred_check_branch
    %15 = sbr.rel (0) target = $region5
  $region4: #{critic_forward.1} parent=0 // pred_region
    _
  $region5: #{critic_forward.1} parent=0 // pred_fallthru
    _
  // Predicated region
  $region6: #{critic_forward.1} parent=0 // pred_check
    _
  $region7: #{critic_forward.1} parent=0 // pred_check_branch
    %17 = sbr.rel (0) target = $region9
  $region8: #{critic_forward.1} parent=0 // pred_region
    _
  $region9: #{critic_forward.1} parent=0 // pred_fallthru
    _
  // Predicated region
  $region10: #{critic_forward.1} parent=0 // pred_check
    _
  $region11: #{critic_forward.1} parent=0 // pred_check_branch
    %19 = sbr.rel (0) target = $region13
  $region12: #{critic_forward.1} parent=0 // pred_region
    _
  $region13: #{critic_forward.1} parent=0 // pred_fallthru
    _
  // Predicated region
  $region14: #{critic_forward.1} parent=0 // pred_check
    _
  $region15: #{critic_forward.1} parent=0 // pred_check_branch
    %21 = sbr.rel (0) target = $region17
  $region16: #{critic_forward.1} parent=0 // pred_region
    _
  $region17: #{critic_forward.1} parent=0 // pred_fallthru
    _
  // Predicated region
  $region18: #{critic_forward.1} parent=0 // pred_check
    _
  $region19: #{critic_forward.1} parent=0 // pred_check_branch
    %23 = sbr.rel (0) target = $region21
  $region20: #{critic_forward.1} parent=0 // pred_region
    _
  $region21: #{critic_forward.1} parent=0 // pred_fallthru
    _
  // Predicated region
  $region22: #{critic_forward.1} parent=0 // pred_check
    _
  $region23: #{critic_forward.1} parent=0 // pred_check_branch
    %25 = sbr.rel (0) target = $region25
  $region24: #{critic_forward.1} parent=0 // pred_region
    _
  $region25: #{critic_forward.1} parent=0 // pred_fallthru
    _
  // Predicated region
  $region26: #{critic_forward.1} parent=0 // pred_check
    _
  $region27: #{critic_forward.1} parent=0 // pred_check_branch
    %27 = sbr.rel (0) target = $region29
  $region28: #{critic_forward.1} parent=0 // pred_region
    _
  $region29: #{critic_forward.1} parent=0 // pred_fallthru
    _
  %v29 = vld [vmem:[%s0] sm:$0xff]
  %v30 = vpack.c.bf16 %v29, %v29
  %v31 = vld [vmem:[%s1] sm:$0xf]
  %v32 = vld [vmem:[%s1 + $0x4] sm:$0xf]
  %v33 = vld [vmem:[%s1 + $0x8] sm:$0xf]
  %v34 = vld [vmem:[%s1 + $0xc] sm:$0xf]
  %v35 = vld [vmem:[%s2] sm:$0x1]
  %v37 = vlaneseq
  %v38 = vshrl.u32 %v37, 7
  %v39 = vsub.s32 0, %v38
  %v40 = vrot.slane %v35, %v39
  %v46 = vunpack.c.l.b16 %v31
  %v47 = vunpack.c.l.b16 %v32
  %v48 = vunpack.c.l.b16 %v33
  %v49 = vunpack.c.l.b16 %v34
  %v50 = vpack.c.b16 %v47, %v46
  %v51 = vpack.c.b16 %v49, %v48
  %vm54 = vcmask 261120
  %v56 = vsel %vm54, %v30, 0
  %58 = vmatprep.subr.bf16.mxu0 0
  %59 = vmatpush1.bf16.msra.mxu0 %v50
  %60 = vmatprep.subr.bf16.mxu0 0
  %61 = vmatpush1.bf16.msra.mxu0 %v51
  %62 = vmatprep.subr.bf16.mxu0 0
  %63 = vmatpush1.bf16.msra.mxu0 0
  %64 = vmatprep.subr.bf16.mxu0 0
  %65 = vmatpush1.bf16.msra.mxu0 0
  %66 = vmatprep.subr.bf16.mxu0 0
  %67 = vmatpush1.bf16.msra.mxu0 0
  %68 = vmatprep.subr.bf16.mxu0 0
  %69 = vmatpush1.bf16.msra.mxu0 0
  %70 = vmatprep.subr.bf16.mxu0 0
  %71 = vmatpush1.bf16.msra.mxu0 0
  %72 = vmatprep.subr.bf16.mxu0 0
  %73 = vmatpush1.bf16.msra.mxu0 0
  %74 = vmatprep.subr.bf16.mxu0 0
  %75 = vmatpush1.bf16.msra.mxu0 0
  %76 = vmatprep.subr.bf16.mxu0 0
  %77 = vmatpush1.bf16.msra.mxu0 0
  %78 = vmatprep.subr.bf16.mxu0 0
  %79 = vmatpush1.bf16.msra.mxu0 0
  %80 = vmatprep.subr.bf16.mxu0 0
  %81 = vmatpush1.bf16.msra.mxu0 0
  %82 = vmatprep.subr.bf16.mxu0 0
  %83 = vmatpush1.bf16.msra.mxu0 0
  %84 = vmatprep.subr.bf16.mxu0 0
  %85 = vmatpush1.bf16.msra.mxu0 0
  %86 = vmatprep.subr.bf16.mxu0 0
  %87 = vmatpush1.bf16.msra.mxu0 0
  %88 = vmatprep.subr.bf16.mxu0 0
  %89 = vmatpush1.bf16.msra.mxu0 0
  %90 = vmatprep.mubr.bf16.mxu0 0
  %91 = vmatmul.mubr.bf16.gmra.mrb[0].mxu0 %v56
  %v92 = vpop.f32.mrb[0].mxu0
  %v93 = vadd.f32 %v40, %v92
  %v94 = vpop.f32.mrb[0].mxu0
  %v95 = vpop.f32.mrb[0].mxu0
  %v96 = vpop.f32.mrb[0].mxu0
  %97 = vdwg.mxu0
  %v98 = vmax.f32 %v93, 0.0
  %v99 = vpack.c.bf16 %v98, %v98
  %v100 = vld [vmem:[%s3] sm:$0xf]
  %v101 = vld [vmem:[%s3 + $0x4] sm:$0xf]
  %v102 = vld [vmem:[%s3 + $0x8] sm:$0xf]
  %v103 = vld [vmem:[%s3 + $0xc] sm:$0xf]
  %v104 = vld [vmem:[%s3 + $0x10] sm:$0xf]
  %v105 = vld [vmem:[%s3 + $0x14] sm:$0xf]
  %v106 = vld [vmem:[%s3 + $0x18] sm:$0xf]
  %v107 = vld [vmem:[%s3 + $0x1c] sm:$0xf]
  %v108 = vld [vmem:[%s4] sm:$0x1]
  %v110 = vlaneseq
  %v111 = vshrl.u32 %v110, 7
  %v112 = vsub.s32 0, %v111
  %v113 = vrot.slane %v108, %v112
  %v123 = vunpack.c.l.b16 %v100
  %v124 = vunpack.c.l.b16 %v101
  %v125 = vunpack.c.l.b16 %v102
  %v126 = vunpack.c.l.b16 %v103
  %v127 = vunpack.c.l.b16 %v104
  %v128 = vunpack.c.l.b16 %v105
  %v129 = vunpack.c.l.b16 %v106
  %v130 = vunpack.c.l.b16 %v107
  %v131 = vpack.c.b16 %v124, %v123
  %v132 = vpack.c.b16 %v126, %v125
  %v133 = vpack.c.b16 %v128, %v127
  %v134 = vpack.c.b16 %v130, %v129
  %vm139 = vcmask 523264
  %v141 = vsel %vm139, %v99, 0
  %143 = vmatprep.subr.bf16.mxu0 0
  %144 = vmatpush1.bf16.msra.mxu0 %v131
  %145 = vmatprep.subr.bf16.mxu0 0
  %146 = vmatpush1.bf16.msra.mxu0 %v132
  %147 = vmatprep.subr.bf16.mxu0 0
  %148 = vmatpush1.bf16.msra.mxu0 %v133
  %149 = vmatprep.subr.bf16.mxu0 0
  %150 = vmatpush1.bf16.msra.mxu0 %v134
  %151 = vmatprep.subr.bf16.mxu0 0
  %152 = vmatpush1.bf16.msra.mxu0 0
  %153 = vmatprep.subr.bf16.mxu0 0
  %154 = vmatpush1.bf16.msra.mxu0 0
  %155 = vmatprep.subr.bf16.mxu0 0
  %156 = vmatpush1.bf16.msra.mxu0 0
  %157 = vmatprep.subr.bf16.mxu0 0
  %158 = vmatpush1.bf16.msra.mxu0 0
  %159 = vmatprep.subr.bf16.mxu0 0
  %160 = vmatpush1.bf16.msra.mxu0 0
  %161 = vmatprep.subr.bf16.mxu0 0
  %162 = vmatpush1.bf16.msra.mxu0 0
  %163 = vmatprep.subr.bf16.mxu0 0
  %164 = vmatpush1.bf16.msra.mxu0 0
  %165 = vmatprep.subr.bf16.mxu0 0
  %166 = vmatpush1.bf16.msra.mxu0 0
  %167 = vmatprep.subr.bf16.mxu0 0
  %168 = vmatpush1.bf16.msra.mxu0 0
  %169 = vmatprep.subr.bf16.mxu0 0
  %170 = vmatpush1.bf16.msra.mxu0 0
  %171 = vmatprep.subr.bf16.mxu0 0
  %172 = vmatpush1.bf16.msra.mxu0 0
  %173 = vmatprep.subr.bf16.mxu0 0
  %174 = vmatpush1.bf16.msra.mxu0 0
  %175 = vmatprep.mubr.bf16.mxu0 0
  %176 = vmatmul.mubr.bf16.gmra.mrb[0].mxu0 %v141
  %v177 = vpop.f32.mrb[0].mxu0
  %v178 = vadd.f32 %v113, %v177
  %v179 = vpop.f32.mrb[0].mxu0
  %v180 = vpop.f32.mrb[0].mxu0
  %v181 = vpop.f32.mrb[0].mxu0
  %182 = vdwg.mxu0
  %v183 = vmax.f32 %v178, 0.0
  %v184 = vpack.c.bf16 %v183, %v183
  %v185 = vld [vmem:[%s5] sm:$0xf]
  %v186 = vld [vmem:[%s5 + $0x4] sm:$0xf]
  %v187 = vld [vmem:[%s5 + $0x8] sm:$0xf]
  %v188 = vld [vmem:[%s5 + $0xc] sm:$0xf]
  %v189 = vld [vmem:[%s5 + $0x10] sm:$0xf]
  %v190 = vld [vmem:[%s5 + $0x14] sm:$0xf]
  %v191 = vld [vmem:[%s5 + $0x18] sm:$0xf]
  %v192 = vld [vmem:[%s5 + $0x1c] sm:$0xf]
  %v193 = vld [vmem:[#allocation2] sm:$0x1]
  %v195 = vlaneseq
  %v196 = vshrl.u32 %v195, 7
  %v197 = vsub.s32 0, %v196
  %v198 = vrot.slane %v193, %v197
  %v208 = vunpack.c.l.b16 %v185
  %v209 = vunpack.c.l.b16 %v186
  %v210 = vunpack.c.l.b16 %v187
  %v211 = vunpack.c.l.b16 %v188
  %v212 = vunpack.c.l.b16 %v189
  %v213 = vunpack.c.l.b16 %v190
  %v214 = vunpack.c.l.b16 %v191
  %v215 = vunpack.c.l.b16 %v192
  %v216 = vpack.c.b16 %v209, %v208
  %v217 = vpack.c.b16 %v211, %v210
  %v218 = vpack.c.b16 %v213, %v212
  %v219 = vpack.c.b16 %v215, %v214
  %v225 = vsel %vm139, %v184, 0
  %227 = vmatprep.subr.bf16.mxu0 0
  %228 = vmatpush1.bf16.msra.mxu0 %v216
  %229 = vmatprep.subr.bf16.mxu0 0
  %230 = vmatpush1.bf16.msra.mxu0 %v217
  %231 = vmatprep.subr.bf16.mxu0 0
  %232 = vmatpush1.bf16.msra.mxu0 %v218
  %233 = vmatprep.subr.bf16.mxu0 0
  %234 = vmatpush1.bf16.msra.mxu0 %v219
  %235 = vmatprep.subr.bf16.mxu0 0
  %236 = vmatpush1.bf16.msra.mxu0 0
  %237 = vmatprep.subr.bf16.mxu0 0
  %238 = vmatpush1.bf16.msra.mxu0 0
  %239 = vmatprep.subr.bf16.mxu0 0
  %240 = vmatpush1.bf16.msra.mxu0 0
  %241 = vmatprep.subr.bf16.mxu0 0
  %242 = vmatpush1.bf16.msra.mxu0 0
  %243 = vmatprep.subr.bf16.mxu0 0
  %244 = vmatpush1.bf16.msra.mxu0 0
  %245 = vmatprep.subr.bf16.mxu0 0
  %246 = vmatpush1.bf16.msra.mxu0 0
  %247 = vmatprep.subr.bf16.mxu0 0
  %248 = vmatpush1.bf16.msra.mxu0 0
  %249 = vmatprep.subr.bf16.mxu0 0
  %250 = vmatpush1.bf16.msra.mxu0 0
  %251 = vmatprep.subr.bf16.mxu0 0
  %252 = vmatpush1.bf16.msra.mxu0 0
  %253 = vmatprep.subr.bf16.mxu0 0
  %254 = vmatpush1.bf16.msra.mxu0 0
  %255 = vmatprep.subr.bf16.mxu0 0
  %256 = vmatpush1.bf16.msra.mxu0 0
  %257 = vmatprep.subr.bf16.mxu0 0
  %258 = vmatpush1.bf16.msra.mxu0 0
  %259 = vmatprep.mubr.bf16.mxu0 0
  %260 = vmatmul.mubr.bf16.gmra.mrb[0].mxu0 %v225
  %v261 = vpop.f32.mrb[0].mxu0
  %v262 = vadd.f32 %v198, %v261
  %v263 = vpop.f32.mrb[0].mxu0
  %v264 = vpop.f32.mrb[0].mxu0
  %v265 = vpop.f32.mrb[0].mxu0
  %266 = vdwg.mxu0
  %vm267 = vcmask 7168
  %268 = vst.msk [vmem:[%s7] sm:$0xff] %vm267, %v262
  // Predicated region
  $region30: #{critic_forward.1} parent=0 // pred_check
    _
  $region31: #{critic_forward.1} parent=0 // pred_check_branch
    %270 = sbr.rel (0) target = $region33
  $region32: #{critic_forward.1} parent=0 // pred_region
    _
  $region33: #{critic_forward.1} parent=0 // pred_fallthru
    _
  // Predicated region
  $region34: #{critic_forward.1} parent=0 // pred_check
    _
  $region35: #{critic_forward.1} parent=0 // pred_check_branch
    %272 = sbr.rel (0) target = $region37
  $region36: #{critic_forward.1} parent=0 // pred_region
    _
  $region37: #{critic_forward.1} parent=0 // pred_fallthru
    _

</llo_original>
